<compile_context>
chip_gen: v6e
topology: v6e:2x2x1
jax: 0.10.0
libtpu: 0.0.40
codegen_flags: <defaults>
</compile_context>

<pallas_src>
import jax
import jax.numpy as jnp
from jax.experimental import pallas as pl
from jax.experimental.pallas import tpu as pltpu


def _round_up(x, m):
    return (x + m - 1) // m * m


# --------------------------------------------------------------------------
# Generation-aware tile caps (v5e/v6e: 128 MiB VMEM -> bigger tiles;
# v7x: 64 MiB physical / 32 MiB default scoped -> tighter caps).
# --------------------------------------------------------------------------
def _vmem_capacity_bytes():
    try:
        return int(pltpu.get_tpu_info().vmem_capacity_bytes)
    except Exception:
        return 64 << 20          # conservative default (v7x per-TensorCore)


_VMEM_CAP = _vmem_capacity_bytes()
_BIG_VMEM = _VMEM_CAP >= (96 << 20)
_TM_CAP = 512 if _BIG_VMEM else 256
_TN_CAP = 512 if _BIG_VMEM else 256
_TK_CAP = 2048 if _BIG_VMEM else 512


def _pick_m(b):
    b_pad = _round_up(b, 8)
    if b_pad <= _TM_CAP:
        return b_pad, b_pad
    b_pad = _round_up(b, _TM_CAP)
    return b_pad, _TM_CAP


def _pick_k(h):
    if h <= _TK_CAP:
        return h, h
    h_pad = _round_up(h, _TK_CAP)
    return h_pad, _TK_CAP


def _pick_n(o_pad):
    if o_pad <= _TN_CAP:
        return o_pad
    if o_pad % _TN_CAP == 0:
        return _TN_CAP
    return 256 if o_pad % 256 == 0 else 128


def _pick_tb(t):
    """Largest divisor of T that is <= 8 (time-block size)."""
    for tb in (8, 7, 6, 5, 4, 3, 2, 1):
        if t % tb == 0:
            return tb
    return 1


# --------------------------------------------------------------------------
# Kernels
# --------------------------------------------------------------------------
def _fc_out_kernel(h_ref, w_ref, b_ref, o_ref, acc_ref):
    """One (tm, tn) tile of  out = h @ W_t + b.  K-reduction on grid axis 2.
    Bias is folded into the accumulator init; inputs cast to bf16 for the MXU,
    accumulation stays f32."""
    k = pl.program_id(2)

    @pl.when(k == 0)
    def _init():
        acc_ref[...] = jnp.broadcast_to(b_ref[...], acc_ref.shape)

    acc_ref[...] += jnp.dot(h_ref[...].astype(jnp.bfloat16), w_ref[...],
                            preferred_element_type=jnp.float32)

    @pl.when(k == pl.num_programs(2) - 1)
    def _store():
        o_ref[...] = acc_ref[...].astype(o_ref.dtype)


def _rnn_seq_kernel(h0_ref, w_ref, b_ref, out_ref, hT_ref):
    """One (batch-tile, time-block) step of the fused RNN loop.

    Grid = (B_tiles, T_blocks); weight/bias use constant index_maps (DMA'd
    once per batch tile); the carried state lives in the hT output block,
    whose index_map is constant over the time axis (VMEM-resident)."""
    t = pl.program_id(1)

    @pl.when(t == 0)
    def _init():
        hT_ref[...] = h0_ref[...]

    h = hT_ref[...]

    # TODO(synk): BaseRNN.recurrence is abstract (NotImplementedError) ->
    # identity placeholder.  Because the state never changes, the fc_out
    # matmul is hoisted to once per time block and broadcast to the Tb output
    # slots.  With a real cell: stream the per-step input, move the matmul
    # back into the per-step loop, update h each step and write
    # hT_ref[...] = h after the loop.
    out = (jnp.dot(h.astype(jnp.bfloat16), w_ref[...],
                   preferred_element_type=jnp.float32)
           + b_ref[...]).astype(out_ref.dtype)

    for i in range(out_ref.shape[0]):      # Tb is a static Python int (<= 8)
        out_ref[i] = out                   # lane-dense (tm_b, O_pad) stores


# --------------------------------------------------------------------------
# Module
# --------------------------------------------------------------------------
class BaseRNNPallas:
    """JAX/Pallas re-implementation of diffscore.nn.rnn.BaseRNN."""

    def __init__(self, input_size, hidden_size, output_size,
                 noise_std=None, key=jax.random.PRNGKey(0)):
        self.input_size = input_size
        self.hidden_size = hidden_size
        self.output_size = output_size
        # TODO(synk): noise_std is stored but never applied (same as BaseRNN).
        self.noise_std = noise_std

        # nn.Linear default init: U(-1/sqrt(fan_in), 1/sqrt(fan_in)).
        k_w, k_b = jax.random.split(key)
        bound = 1.0 / (hidden_size ** 0.5)
        self.w_out = jax.random.uniform(
            k_w, (output_size, hidden_size), jnp.float32, -bound, bound)
        self.b_out = jax.random.uniform(
            k_b, (output_size,), jnp.float32, -bound, bound)

        # Pre-transposed, lane-padded, *bf16* weight built ONCE here:
        #   * transpose hoisted out of forward()
        #   * O padded to a multiple of 128 -> full-128-lane kernel stores
        #   * bf16 storage halves weight HBM traffic and feeds the MXU its
        #     native input type (accumulation stays f32 in the kernels).
        self._o_pad = _round_up(output_size, 128)
        self._h_pad, self._tk = _pick_k(hidden_size)
        self.w_out_t_pad = (
            jnp.zeros((self._h_pad, self._o_pad), jnp.float32)
            .at[:hidden_size, :output_size].set(self.w_out.T)
        ).astype(jnp.bfloat16)
        self.b_out_pad = (
            jnp.zeros((1, self._o_pad), jnp.float32)
            .at[:, :output_size].set(self.b_out))

    # ---- abstract pieces of BaseRNN --------------------------------------
    def init_state(self, batch_size):
        raise NotImplementedError          # abstract in the reference module

    def recurrence(self, inp, h):
        # TODO(synk): abstract in BaseRNN (NotImplementedError); identity here.
        return h

    # ---- single-step forward (BaseRNN.forward contract) -------------------
    def forward(self, inp, state):
        """
        Args:
            inp:   (batch, input_size)
            state: (batch, hidden_size)
        Returns:
            out:        (batch, output_size)
            next_state: (batch, hidden_size)
        """
        next_state = self.recurrence(inp, state)

        B = next_state.shape[0]
        H, O = self.hidden_size, self.output_size
        O_pad, H_pad, tk = self._o_pad, self._h_pad, self._tk
        B_pad, tm = _pick_m(B)
        tn = _pick_n(O_pad)

        h = next_state
        if B_pad != B or H_pad != H:          # pad only when actually needed
            h = jnp.pad(h, ((0, B_pad - B), (0, H_pad - H)))

        grid = (B_pad // tm, O_pad // tn, H_pad // tk)
        # TODO(synk): when grid == (1, 1, >1) on v7x, split K across two
        # "parallel" partial outputs summed by XLA to use both TensorCores.

        out_pad = pl.pallas_call(
            _fc_out_kernel,
            out_shape=jax.ShapeDtypeStruct((B_pad, O_pad), jnp.float32),
            grid=grid,
            in_specs=[
                pl.BlockSpec((tm, tk), lambda i, j, k: (i, k)),
                pl.BlockSpec((tk, tn), lambda i, j, k: (k, j)),
                pl.BlockSpec((1, tn), lambda i, j, k: (0, j)),
            ],
            out_specs=pl.BlockSpec((tm, tn), lambda i, j, k: (i, j)),
            scratch_shapes=[pltpu.VMEM((tm, tn), jnp.float32)],
            compiler_params=pltpu.CompilerParams(
                dimension_semantics=("parallel", "parallel", "arbitrary")),
        )(h, self.w_out_t_pad, self.b_out_pad)

        out = out_pad if (B_pad == B and O_pad == O) else out_pad[:B, :O]
        return out, next_state

    __call__ = forward

    # ---- fused time loop: one pallas_call for the whole sequence ----------
    def forward_sequence(self, inps, state):
        """Equivalent to calling forward() once per timestep.

        Args:
            inps:  (T, batch, input_size)   (unused by the identity cell; NOT
                                             streamed into the kernel)
            state: (batch, hidden_size)
        Returns:
            outs:       (T, batch, output_size)
            next_state: (batch, hidden_size)
        """
        T, B, _ = inps.shape
        H, O = self.hidden_size, self.output_size
        O_pad, H_pad = self._o_pad, self._h_pad
        B_pad, tm_b = _pick_m(B)
        Tb = _pick_tb(T)

        h0 = state
        if B_pad != B or H_pad != H:
            h0 = jnp.pad(h0, ((0, B_pad - B), (0, H_pad - H)))

        # Explicit VMEM budget (resident bf16 weight + double-buffered blocks);
        # raise the scoped limit only when the defaults would be too tight.
        w_bytes = H_pad * O_pad * 2
        h_bytes = tm_b * H_pad * 4
        out_bytes = Tb * tm_b * O_pad * 4
        b_bytes = O_pad * 4
        est = 2 * (w_bytes + 2 * h_bytes + out_bytes + b_bytes)
        cp_kwargs = dict(dimension_semantics=("parallel", "arbitrary"))
        if est > (16 << 20):
            cp_kwargs["vmem_limit_bytes"] = min(
                int(est * 2), max(_VMEM_CAP - (4 << 20), 32 << 20))

        outs_pad, hT = pl.pallas_call(
            _rnn_seq_kernel,
            out_shape=(
                jax.ShapeDtypeStruct((T, B_pad, O_pad), jnp.float32),
                jax.ShapeDtypeStruct((B_pad, H_pad), jnp.float32),
            ),
            grid=(B_pad // tm_b, T // Tb),
            in_specs=[
                pl.BlockSpec((tm_b, H_pad), lambda b, t: (b, 0)),   # h0, per b-tile
                pl.BlockSpec((H_pad, O_pad), lambda b, t: (0, 0)),  # weight resident
                pl.BlockSpec((1, O_pad), lambda b, t: (0, 0)),      # bias resident
            ],
            out_specs=(
                pl.BlockSpec((Tb, tm_b, O_pad), lambda b, t: (t, b, 0)),
                pl.BlockSpec((tm_b, H_pad), lambda b, t: (b, 0)),   # carried state
            ),
            compiler_params=pltpu.CompilerParams(**cp_kwargs),
        )(h0, self.w_out_t_pad, self.b_out_pad)

        outs = (outs_pad if (B_pad == B and O_pad == O)
                else outs_pad[:, :B, :O])
        next_state = hT if (B_pad == B and H_pad == H) else hT[:B, :H]
        return outs, next_state


# --------------------------------------------------------------------------
# Demo / correctness check
# --------------------------------------------------------------------------
if __name__ == "__main__":
    batch, input_size, hidden_size, output_size = 8, 4, 32, 16
    seq_len = 8

    key = jax.random.PRNGKey(0)
    k_inp, k_state, k_params, k_seq = jax.random.split(key, 4)

    inp = jax.random.normal(k_inp, (batch, input_size), jnp.float32)
    state = jax.random.normal(k_state, (batch, hidden_size), jnp.float32)
    inps = jax.random.normal(k_seq, (seq_len, batch, input_size), jnp.float32)

    model = BaseRNNPallas(input_size, hidden_size, output_size, key=k_params)

    # ---- single step (matches BaseRNN.forward contract) ----
    out, next_state = model(inp, state)
    out = jax.block_until_ready(out)
    next_state = jax.block_until_ready(next_state)

    ref = next_state @ model.w_out.T + model.b_out
    assert out.shape == (batch, output_size)
    assert next_state.shape == (batch, hidden_size)
    # bf16 weight / bf16 activation inputs with f32 accumulation -> ~1e-3 err.
    assert jnp.allclose(out, ref, atol=2e-2, rtol=2e-2)

    # ---- fused time loop: one pallas_call for all seq_len steps ----
    outs, final_state = model.forward_sequence(inps, state)
    outs = jax.block_until_ready(outs)
    final_state = jax.block_until_ready(final_state)

    h = state
    refs = []
    for t in range(seq_len):
        h = model.recurrence(inps[t], h)
        refs.append(h @ model.w_out.T + model.b_out)
    refs = jnp.stack(refs)
    assert outs.shape == (seq_len, batch, output_size)
    assert final_state.shape == (batch, hidden_size)
    assert jnp.allclose(outs, refs, atol=2e-2, rtol=2e-2)
    assert jnp.allclose(final_state, h, atol=1e-5, rtol=1e-5)

    print("KERNEL_OK")
</pallas_src>

<mosaic_0001>
module attributes {stable_mosaic.version = 11 : i64} {
  func.func @_fc_out_kernel(%arg0: i32, %arg1: i32, %arg2: i32, %arg3: memref<8x32xf32, #tpu.memory_space<vmem>>, %arg4: memref<32x128xbf16, #tpu.memory_space<vmem>>, %arg5: memref<1x128xf32, #tpu.memory_space<vmem>>, %arg6: memref<8x128xf32, #tpu.memory_space<vmem>>, %arg7: memref<8x128xf32, #tpu.memory_space<vmem>>) attributes {dimension_semantics = [#tpu.dimension_semantics<parallel>, #tpu.dimension_semantics<parallel>, #tpu.dimension_semantics<arbitrary>], iteration_bounds = array<i64: 1, 1, 1>, scalar_prefetch = 0 : i64, scratch_operands = 1 : i64, tpu.core_type = #tpu.core_type<tc>, window_params = [{transform_indices = @transform_0, window_bounds = array<i64: 8, 32>}, {transform_indices = @transform_1, window_bounds = array<i64: 32, 128>}, {transform_indices = @transform_2, window_bounds = array<i64: 1, 128>}, {transform_indices = @transform_3, window_bounds = array<i64: 8, 128>}]} {
    %c0_i32 = arith.constant 0 : i32
    %0 = arith.cmpi eq, %arg2, %c0_i32 : i32
    %1 = arith.extui %0 : i1 to i32
    %c0_i32_0 = arith.constant 0 : i32
    %2 = arith.cmpi ne, %1, %c0_i32_0 : i32
    scf.if %2 {
      %c0_10 = arith.constant 0 : index
      %c0_11 = arith.constant 0 : index
      %13 = vector.load %arg5[%c0_10, %c0_11] : memref<1x128xf32, #tpu.memory_space<vmem>>, vector<1x128xf32>
      %14 = vector.shape_cast %13 : vector<1x128xf32> to vector<1x128xf32>
      %15 = vector.broadcast %14 : vector<1x128xf32> to vector<8x128xf32>
      %c0_12 = arith.constant 0 : index
      %c0_13 = arith.constant 0 : index
      %16 = vector.load %arg7[%c0_12, %c0_13] : memref<8x128xf32, #tpu.memory_space<vmem>>, vector<8x128xf32>
      tpu.vector_store %arg7[%c0_12, %c0_13], %15 {strides = array<i32>} : memref<8x128xf32, #tpu.memory_space<vmem>>, vector<8x128xf32>,
    } else {
    }
    %c0 = arith.constant 0 : index
    %c0_1 = arith.constant 0 : index
    %3 = vector.load %arg7[%c0, %c0_1] : memref<8x128xf32, #tpu.memory_space<vmem>>, vector<8x128xf32>
    %c0_2 = arith.constant 0 : index
    %c0_3 = arith.constant 0 : index
    %4 = vector.load %arg3[%c0_2, %c0_3] : memref<8x32xf32, #tpu.memory_space<vmem>>, vector<8x32xf32>
    %5 = arith.truncf %4 : vector<8x32xf32> to vector<8x32xbf16>
    %c0_4 = arith.constant 0 : index
    %c0_5 = arith.constant 0 : index
    %6 = vector.load %arg4[%c0_4, %c0_5] : memref<32x128xbf16, #tpu.memory_space<vmem>>, vector<32x128xbf16>
    %cst = arith.constant dense<0.000000e+00> : vector<8x128xf32>
    %7 = tpu.matmul %5, %6, %cst {dimension_numbers = #tpu.dot_dimension_numbers<[1], [0], [0], [1], [0, 0, 1, 1], [], []>} : vector<8x32xbf16>, vector<32x128xbf16>, vector<8x128xf32> -> vector<8x128xf32>
    %8 = arith.addf %3, %7 : vector<8x128xf32>
    %c0_6 = arith.constant 0 : index
    %c0_7 = arith.constant 0 : index
    %9 = vector.load %arg7[%c0_6, %c0_7] : memref<8x128xf32, #tpu.memory_space<vmem>>, vector<8x128xf32>
    tpu.vector_store %arg7[%c0_6, %c0_7], %8 {strides = array<i32>} : memref<8x128xf32, #tpu.memory_space<vmem>>, vector<8x128xf32>,
    %c0_i32_8 = arith.constant 0 : i32
    %10 = arith.cmpi eq, %arg2, %c0_i32_8 : i32
    %11 = arith.extui %10 : i1 to i32
    %c0_i32_9 = arith.constant 0 : i32
    %12 = arith.cmpi ne, %11, %c0_i32_9 : i32
    scf.if %12 {
      %c0_10 = arith.constant 0 : index
      %c0_11 = arith.constant 0 : index
      %13 = vector.load %arg7[%c0_10, %c0_11] : memref<8x128xf32, #tpu.memory_space<vmem>>, vector<8x128xf32>
      %c0_12 = arith.constant 0 : index
      %c0_13 = arith.constant 0 : index
      %14 = vector.load %arg6[%c0_12, %c0_13] : memref<8x128xf32, #tpu.memory_space<vmem>>, vector<8x128xf32>
      tpu.vector_store %arg6[%c0_12, %c0_13], %13 {strides = array<i32>} : memref<8x128xf32, #tpu.memory_space<vmem>>, vector<8x128xf32>,
    } else {
    }
    return
  }
  func.func @transform_0(%arg0: i32, %arg1: i32, %arg2: i32) -> (i32, i32) {
    %c0_i32 = arith.constant 0 : i32
    return %arg0, %arg2 : i32, i32
  }
  func.func @transform_1(%arg0: i32, %arg1: i32, %arg2: i32) -> (i32, i32) {
    %c0_i32 = arith.constant 0 : i32
    return %arg2, %arg1 : i32, i32
  }
  func.func @transform_2(%arg0: i32, %arg1: i32, %arg2: i32) -> (i32, i32) {
    %c0_i32 = arith.constant 0 : i32
    %c0_i32_0 = arith.constant 0 : i32
    return %c0_i32, %arg1 : i32, i32
  }
  func.func @transform_3(%arg0: i32, %arg1: i32, %arg2: i32) -> (i32, i32) {
    %c0_i32 = arith.constant 0 : i32
    return %arg0, %arg1 : i32, i32
  }
}

</mosaic_0001>

<llo_original>
// kernel: tpu_custom_call.1
$region0: #{tpu_custom_call.1}
  #allocation0 [shape = 'u32[]', space=smem, size = 0x4, offset = 0x4, fixed_abs, tag = 'smem constant byte address 0x4 - core index']
  #allocation1 [shape = 'u32[144,128]{1,0:T(1,128)}', space=vmem, size = 0x12000, scoped, tag = 'internal scratch']
  #allocation2 [shape = 'f32[8,128]{1,0:T(8,128)}', space=vmem, size = 0x1000, scoped, tag = 'scratch operand']
  %s0 = inlined_call_operand.hbm [shape: f32[8,32], index: 0, kind: input, shape index: {}]
  %s1 = inlined_call_operand.hbm [shape: bf16[32,128], index: 1, kind: input, shape index: {}]
  %s2 = inlined_call_operand.vmem [shape: f32[1,128], index: 2, kind: input, shape index: {}]
  %s3 = inlined_call_operand.hbm [shape: f32[8,128], index: 3, kind: output, shape index: {}]
  %s4 = sld [smem:[#allocation0]]
  $region38: #{tpu_custom_call.1} parent=0
    _
  %s6 = ssub.s32 1, %s4
  %s7 = scalar_select 0, %s6, %s4
  $region1: #{tpu_custom_call.1} parent=0
    #allocation3 [shape = 'u8[4096]{0}', space=vmem, size = 0x1000, scoped, tag = 'input window, operand 0, single buffered']
    #allocation4 [shape = 's32[1]{0}', space=sflag, size = 0x4, scoped, tag = 'scoped memory for tpu_custom_call.1']
    #allocation5 [shape = 's32[1]{0}', space=sflag, size = 0x4, scoped, tag = 'scoped memory for tpu_custom_call.1']
    #allocation6 [shape = 'u8[8192]{0}', space=vmem, size = 0x2000, scoped, tag = 'input window, operand 1, single buffered']
    #allocation7 [shape = 's32[1]{0}', space=sflag, size = 0x4, scoped, tag = 'scoped memory for tpu_custom_call.1']
    #allocation8 [shape = 'u8[4096]{0}', space=vmem, size = 0x1000, scoped, tag = 'output window, operand 0, single buffered']
    %8 = vsyncpa [#allocation4], 0
    %9 = vsyncpa [#allocation7], 0
    %10 = vsyncpa [#allocation5], 0
    // Predicated region
    $region2: #{tpu_custom_call.1} parent=1 // pred_check
      _
    $region3: #{tpu_custom_call.1} parent=1 // pred_check_branch
      %12 = sbr.rel (0) target = $region5
    $region4: #{tpu_custom_call.1} parent=1 // pred_region
      %s14 = ssub.s32 128, 128
      %15 = vsyncadd [#allocation4], %s14
      %s17 = sshll.u32 [#allocation3], 4
      %s18 = int_to_ptr.vmem [resolvable:$true] %s17
      %20 = dma.hbm_to_vmem [thread:$0]  %s0, 128, %s18, [#allocation4]
    $region5: #{tpu_custom_call.1} parent=1 // pred_fallthru
      _
    // Predicated region
    $region6: #{tpu_custom_call.1} parent=1 // pred_check
      _
    $region7: #{tpu_custom_call.1} parent=1 // pred_check_branch
      %22 = sbr.rel (0) target = $region9
    $region8: #{tpu_custom_call.1} parent=1 // pred_region
      %s24 = ssub.s32 256, 256
      %25 = vsyncadd [#allocation7], %s24
      %s26 = sshll.u32 [#allocation6], 4
      %s27 = int_to_ptr.vmem [resolvable:$true] %s26
      %32 = dma.hbm_to_vmem [thread:$0]  %s1, 256, %s27, [#allocation7], 64, 64, 4
    $region9: #{tpu_custom_call.1} parent=1 // pred_fallthru
      _
    // Predicated region
    $region10: #{tpu_custom_call.1} parent=1 // pred_check
      _
    $region11: #{tpu_custom_call.1} parent=1 // pred_check_branch
      %34 = sbr.rel (0) target = $region13
    $region12: #{tpu_custom_call.1} parent=1 // pred_region
      _
    $region13: #{tpu_custom_call.1} parent=1 // pred_fallthru
      _
    // Predicated region
    $region14: #{tpu_custom_call.1} parent=1 // pred_check
      _
    $region15: #{tpu_custom_call.1} parent=1 // pred_check_branch
      %36 = sbr.rel (0) target = $region17
    $region16: #{tpu_custom_call.1} parent=1 // pred_region
      %37 = dma.done [#allocation4], 128
    $region17: #{tpu_custom_call.1} parent=1 // pred_fallthru
      _
    // Predicated region
    $region18: #{tpu_custom_call.1} parent=1 // pred_check
      _
    $region19: #{tpu_custom_call.1} parent=1 // pred_check_branch
      %39 = sbr.rel (0) target = $region21
    $region20: #{tpu_custom_call.1} parent=1 // pred_region
      %40 = dma.done [#allocation7], 256
    $region21: #{tpu_custom_call.1} parent=1 // pred_fallthru
      _
    %p42 = scmp.eq.s32.totalorder 0, 0
    // Predicated region
    $region22: #{tpu_custom_call.1} parent=1 // pred_check
      %p43 = pneg %p42
    $region23: #{tpu_custom_call.1} parent=1 // pred_check_branch
      %45 = sbr.rel (%p43) target = $region25
    $region24: #{tpu_custom_call.1} parent=1 // pred_region
      %v46 = vld [vmem:[%s2] sm:$0x1]
      %v48 = vlaneseq
      %v49 = vshrl.u32 %v48, 7
      %v50 = vsub.s32 0, %v49
      %v51 = vrot.slane %v46, %v50
      %53 = vst [vmem:[#allocation2] sm:$0xff] %v51
    $region25: #{tpu_custom_call.1} parent=1 // pred_fallthru
      _
    %v54 = vld [vmem:[#allocation2] sm:$0xff]
    %v55 = vld [vmem:[#allocation3] sm:$0xff]
    %v56 = vpack.c.bf16 %v55, %v55
    %v57 = vld [vmem:[#allocation6] sm:$0xf]
    %v58 = vld [vmem:[#allocation6 + $0x4] sm:$0xf]
    %v59 = vld [vmem:[#allocation6 + $0x8] sm:$0xf]
    %v60 = vld [vmem:[#allocation6 + $0xc] sm:$0xf]
    %v65 = vunpack.c.l.b16 %v57
    %v66 = vunpack.c.l.b16 %v58
    %v67 = vunpack.c.l.b16 %v59
    %v68 = vunpack.c.l.b16 %v60
    %v69 = vpack.c.b16 %v66, %v65
    %v70 = vpack.c.b16 %v68, %v67
    %vm73 = vcmask 261120
    %v75 = vsel %vm73, %v56, 0
    %77 = vmatprep.subr.bf16.mxu0 0
    %78 = vmatpush1.bf16.msra.mxu0 0
    %79 = vmatprep.subr.bf16.mxu0 0
    %80 = vmatpush1.bf16.msra.mxu0 0
    %81 = vmatprep.subr.bf16.mxu0 0
    %82 = vmatpush1.bf16.msra.mxu0 0
    %83 = vmatprep.subr.bf16.mxu0 0
    %84 = vmatpush1.bf16.msra.mxu0 0
    %85 = vmatprep.subr.bf16.mxu0 0
    %86 = vmatpush1.bf16.msra.mxu0 0
    %87 = vmatprep.subr.bf16.mxu0 0
    %88 = vmatpush1.bf16.msra.mxu0 0
    %89 = vmatprep.subr.bf16.mxu0 0
    %90 = vmatpush1.bf16.msra.mxu0 %v70
    %91 = vmatprep.subr.bf16.mxu0 0
    %92 = vmatpush1.bf16.msra.mxu0 %v69
    %93 = vmatprep.subr.bf16.mxu0 0
    %94 = vmatpush2.bf16.msra.mxu0 0
    %95 = vmatprep.subr.bf16.mxu0 0
    %96 = vmatpush2.bf16.msra.mxu0 0
    %97 = vmatprep.subr.bf16.mxu0 0
    %98 = vmatpush2.bf16.msra.mxu0 0
    %99 = vmatprep.subr.bf16.mxu0 0
    %100 = vmatpush2.bf16.msra.mxu0 0
    %101 = vmatprep.subr.bf16.mxu0 0
    %102 = vmatpush2.bf16.msra.mxu0 0
    %103 = vmatprep.subr.bf16.mxu0 0
    %104 = vmatpush2.bf16.msra.mxu0 0
    %105 = vmatprep.subr.bf16.mxu0 0
    %106 = vmatpush2.bf16.msra.mxu0 0
    %107 = vmatprep.subr.bf16.mxu0 0
    %108 = vmatpush2.bf16.msra.mxu0 0
    %109 = vmatprep.mubr.bf16.mxu0 0
    %110 = vmatmul.mubr.bf16.gmra.mxu0 %v75
    %v111 = vpop.f32.mrf.mxu0
    %v112 = vadd.f32 0.0, %v111
    %v113 = vpop.f32.mrf.mxu0
    %v114 = vpop.f32.mrf.mxu0
    %v115 = vpop.f32.mrf.mxu0
    %116 = vdwg.mxu0
    %v117 = vadd.f32 %v54, %v112
    %118 = vst [vmem:[#allocation2] sm:$0xff] %v117
    // Predicated region
    $region26: #{tpu_custom_call.1} parent=1 // pred_check
      %p119 = pneg %p42
    $region27: #{tpu_custom_call.1} parent=1 // pred_check_branch
      %121 = sbr.rel (%p119) target = $region29
    $region28: #{tpu_custom_call.1} parent=1 // pred_region
      %v122 = vld [vmem:[#allocation2] sm:$0xff]
      %123 = vst [vmem:[#allocation8] sm:$0xff] %v122
    $region29: #{tpu_custom_call.1} parent=1 // pred_fallthru
      _
    // Predicated region
    $region30: #{tpu_custom_call.1} parent=1 // pred_check
      _
    $region31: #{tpu_custom_call.1} parent=1 // pred_check_branch
      %125 = sbr.rel (0) target = $region33
    $region32: #{tpu_custom_call.1} parent=1 // pred_region
      %s127 = ssub.s32 128, 128
      %128 = vsyncadd [#allocation5], %s127
      %s130 = sshll.u32 [#allocation8], 4
      %s131 = int_to_ptr.vmem [resolvable:$true] %s130
      %133 = dma.vmem_to_hbm [thread:$0]  %s131, 128, %s3, [#allocation5]
    $region33: #{tpu_custom_call.1} parent=1 // pred_fallthru
      _
    // Predicated region
    $region34: #{tpu_custom_call.1} parent=1 // pred_check
      _
    $region35: #{tpu_custom_call.1} parent=1 // pred_check_branch
      %135 = sbr.rel (0) target = $region37
    $region36: #{tpu_custom_call.1} parent=1 // pred_region
      %136 = dma.done [#allocation5], 128
    $region37: #{tpu_custom_call.1} parent=1 // pred_fallthru
      _
    %137 = vsyncpa [#allocation4], 1
    %138 = vsyncpa [#allocation7], 1
    %139 = vsyncpa [#allocation5], 1

</llo_original>
